<compile_context>
chip_gen: v5e
topology: v5e:2x2
jax: 0.10.0
libtpu: 0.0.40
codegen_flags: <defaults>
</compile_context>

<pallas_src>
import jax
import jax.numpy as jnp
from jax import lax
from jax.experimental import pallas as pl
from jax.experimental.pallas import tpu as pltpu


def _round_up(x: int, m: int) -> int:
    return (x + m - 1) // m * m


def _make_fused_kernel(k_max: int):
    def kernel(word_ref, w_ref, bias_ref, mask_ref, out_ref):
        # word_ref : [TB, L_pad] int32  (char ids, padded with -1)
        # w_ref    : [k_max*V, F_pad]   bf16  (embedding folded into conv)
        # bias_ref : [1, F_pad]         f32
        # mask_ref : [l_out, F_pad]     f32  (0 valid / -1e30 invalid)
        # out_ref  : [TB, F_pad]        f32
        tb = word_ref.shape[0]
        kV, f_pad = w_ref.shape
        V = kV // k_max
        l_out = mask_ref.shape[0]

        idx = word_ref[...]                                         # [TB, L_pad]

        # Unified im2col over char *ids*, one-hot per tap (pad id -1 -> all-0).
        iota_v = lax.broadcasted_iota(jnp.int32, (tb, l_out, V), 2)
        taps = []
        for dk in range(k_max):
            oh = (idx[:, dk:dk + l_out][:, :, None] == iota_v)
            taps.append(oh.astype(jnp.bfloat16))                    # [TB,l_out,V]
        x2 = jnp.concatenate(taps, axis=-1).reshape(tb * l_out, kV)

        # ONE packed matmul for every branch, f32 accumulation.
        conv = jnp.dot(x2, w_ref[...], preferred_element_type=jnp.float32)
        conv = conv.reshape(tb, l_out, f_pad)

        # Masked temporal max (single full-lane reduction), then bias, store.
        pooled = jnp.max(conv + mask_ref[...][None, :, :], axis=1)  # [TB,F_pad]
        out_ref[...] = pooled + bias_ref[...]

    return kernel


def _vmem_bytes(tile_b, l_pad, l_out, kv, f_pad):
    """Rough per-tile VMEM footprint (double-buffered tiles + intermediates)."""
    word_t = 2 * tile_b * l_pad * 4
    w_t = 2 * kv * f_pad * 2
    small = 2 * (l_out + 1) * f_pad * 4                 # mask + bias
    out_t = 2 * tile_b * f_pad * 4
    onehot = 3 * tile_b * l_out * kv * 2                # compare + bf16 copies
    conv = 2 * tile_b * l_out * f_pad * 4
    return word_t + w_t + small + out_t + onehot + conv


def char_cnn_fused(word, embedding, conv_ws, conv_bs, kernel_sizes,
                   word_emb_dim, *, tile_b=None):
    """word [B, L] int32 -> y [B, word_emb_dim] f32 (fused CharCNN forward)."""
    B, L = word.shape
    V, C = embedding.shape
    sum_f = sum(f for _, f in kernel_sizes)
    assert sum_f <= word_emb_dim, "sum(num_features) must fit in word_emb_dim"

    k_max = max(k for k, _ in kernel_sizes)
    k_min = min(k for k, _ in kernel_sizes)
    l_out = L - k_min + 1                      # unified time extent
    l_pad = l_out + k_max - 1                  # padded char length
    f_pad = _round_up(max(word_emb_dim, 1), 128)   # lane-dense output slab
    kv = k_max * V

    # ---- Fold the embedding into the conv weights, pack all branches. ----
    e32 = embedding.astype(jnp.float32)                          # [V, C]
    w_packed = jnp.zeros((kv, f_pad), jnp.float32)
    mask = jnp.zeros((l_out, f_pad), jnp.float32)
    NEG = jnp.float32(-1e30)
    col = 0
    for (k, f), w in zip(kernel_sizes, conv_ws):                 # w: [k, C, F]
        tw = jnp.einsum('vc,kcf->kvf', e32, w.astype(jnp.float32))   # [k, V, F]
        for dk in range(k):
            w_packed = w_packed.at[dk * V:(dk + 1) * V, col:col + f].set(tw[dk])
        valid = L - k + 1
        if valid < l_out:
            mask = mask.at[valid:, col:col + f].set(NEG)
        col += f
    w_packed = w_packed.astype(jnp.bfloat16)

    bias_packed = jnp.concatenate(
        [b.astype(jnp.float32) for b in conv_bs]
        + [jnp.zeros((f_pad - sum_f,), jnp.float32)]).reshape(1, f_pad)

    # Pad char ids so every tap slice is in bounds; pad id -1 -> zero one-hot.
    word_p = jnp.pad(word.astype(jnp.int32), ((0, 0), (0, l_pad - L)),
                     constant_values=-1)

    # ---- Tile B: >=2 grid steps on moderate/large B (v7x megacore +
    # ---- pipelining), sized against an explicit VMEM budget. ----
    if tile_b is None:
        if B >= 16:
            tile_b = min(128, _round_up(max(pl.cdiv(B, 2), 8), 8))
        else:
            tile_b = B
    budget = 40 * 1024 * 1024                  # headroom under v7x 64 MiB
    while tile_b > 8 and _vmem_bytes(tile_b, l_pad, l_out, kv, f_pad) > budget:
        tile_b = max(8, _round_up(tile_b // 2, 8))
    est = _vmem_bytes(tile_b, l_pad, l_out, kv, f_pad)
    vmem_limit = int(min(64 * 1024 * 1024, max(32 * 1024 * 1024, 2 * est)))

    in_specs = [
        pl.BlockSpec((tile_b, l_pad), lambda i: (i, 0)),   # word, tiled over B
        pl.BlockSpec((kv, f_pad), lambda i: (0, 0)),       # packed folded weight
        pl.BlockSpec((1, f_pad), lambda i: (0, 0)),        # packed bias
        pl.BlockSpec((l_out, f_pad), lambda i: (0, 0)),    # time-validity mask
    ]

    out = pl.pallas_call(
        _make_fused_kernel(k_max),
        out_shape=jax.ShapeDtypeStruct((B, f_pad), jnp.float32),
        grid_spec=pltpu.PrefetchScalarGridSpec(
            num_scalar_prefetch=0,
            grid=(pl.cdiv(B, tile_b),),
            in_specs=in_specs,
            out_specs=pl.BlockSpec((tile_b, f_pad), lambda i: (i, 0)),
        ),
        compiler_params=pltpu.CompilerParams(
            dimension_semantics=("parallel",),
            vmem_limit_bytes=vmem_limit),
    )(word_p, w_packed, bias_packed, mask)

    return out[:, :word_emb_dim]


class CharCNNParams:
    """Deterministic parameter container matching the PyTorch __init__ shapes."""

    def __init__(self, vocab_size, char_emb_dim, word_emb_dim, kernel_sizes,
                 char_len, key):
        self.char_len = char_len
        self.word_emb_dim = word_emb_dim
        self.kernel_sizes = kernel_sizes

        keys = jax.random.split(key, 1 + 2 * len(kernel_sizes))
        # nn.Embedding(vocab_size, char_emb_dim)
        self.embedding = jax.random.normal(
            keys[0], (vocab_size, char_emb_dim), dtype=jnp.float32) * 0.1

        # nn.Conv1d(char_emb_dim, num_features, kernel_size), stored [k, C, F].
        self.conv_w = []
        self.conv_b = []
        for i, (k, f) in enumerate(kernel_sizes):
            wk = jax.random.normal(
                keys[1 + 2 * i], (k, char_emb_dim, f), dtype=jnp.float32) * 0.1
            bk = jax.random.normal(
                keys[2 + 2 * i], (f,), dtype=jnp.float32) * 0.1
            self.conv_w.append(wk)
            self.conv_b.append(bk)


def char_cnn_forward(params: CharCNNParams, word):
    """word: [B, char_len] int32 -> y: [B, word_emb_dim] f32."""
    return char_cnn_fused(word, params.embedding, params.conv_w, params.conv_b,
                          params.kernel_sizes, params.word_emb_dim)


def char_cnn_reference(params: CharCNNParams, word):
    """Pure-JAX f32 reference mirroring the PyTorch forward."""
    B, L = word.shape
    emb = params.embedding[word]                                 # [B, L, C]
    pooled = []
    for (k, f), w, b in zip(params.kernel_sizes, params.conv_w, params.conv_b):
        l_out = L - k + 1
        acc = jnp.zeros((B, l_out, f), jnp.float32)
        for dk in range(k):
            acc = acc + jnp.einsum('blc,cf->blf', emb[:, dk:dk + l_out, :],
                                   w[dk])
        pooled.append(jnp.max(acc + b[None, None, :], axis=1))
    cat = jnp.concatenate(pooled, axis=1)
    y = jnp.zeros((B, params.word_emb_dim), jnp.float32)
    return y.at[:, :cat.shape[1]].set(cat)


if __name__ == "__main__":
    # Small, module-consistent shapes.
    vocab_size = 32
    char_emb_dim = 8
    char_len = 16
    kernel_sizes = [[2, 8], [3, 16], [4, 8]]   # sum of features <= word_emb_dim
    word_emb_dim = 32
    batch = 2

    key = jax.random.PRNGKey(0)
    pkey, dkey = jax.random.split(key)
    params = CharCNNParams(vocab_size, char_emb_dim, word_emb_dim,
                           kernel_sizes, char_len, pkey)

    word = jax.random.randint(dkey, (batch, char_len), 0, vocab_size,
                              dtype=jnp.int32)

    y = char_cnn_forward(params, word)
    jax.block_until_ready(y)

    assert y.shape == (batch, word_emb_dim)
    assert y.dtype == jnp.float32
    # bf16 folded weights with f32 accumulation -> loose tolerance vs f32 ref.
    y_ref = char_cnn_reference(params, word)
    assert jnp.allclose(y, y_ref, atol=1e-2, rtol=5e-2), (
        f"max abs err {jnp.max(jnp.abs(y - y_ref))}")
    print("KERNEL_OK")
</pallas_src>

<mosaic_0001>
module attributes {stable_mosaic.version = 11 : i64} {
  func.func @kernel(%arg0: i32, %arg1: memref<2x18xi32, #tpu.memory_space<vmem>>, %arg2: memref<128x128xbf16, #tpu.memory_space<vmem>>, %arg3: memref<1x128xf32, #tpu.memory_space<vmem>>, %arg4: memref<15x128xf32, #tpu.memory_space<vmem>>, %arg5: memref<2x128xf32, #tpu.memory_space<vmem>>) attributes {dimension_semantics = [#tpu.dimension_semantics<parallel>], iteration_bounds = array<i64: 1>, scalar_prefetch = 0 : i64, scratch_operands = 0 : i64, tpu.core_type = #tpu.core_type<tc>, window_params = [{transform_indices = @transform_0, window_bounds = array<i64: 2, 18>}, {pipeline_mode = #tpu.pipeline_mode<synchronous>, transform_indices = @transform_1, window_bounds = array<i64: 128, 128>}, {pipeline_mode = #tpu.pipeline_mode<synchronous>, transform_indices = @transform_2, window_bounds = array<i64: 1, 128>}, {pipeline_mode = #tpu.pipeline_mode<synchronous>, transform_indices = @transform_3, window_bounds = array<i64: 15, 128>}, {transform_indices = @transform_4, window_bounds = array<i64: 2, 128>}]} {
    %c0 = arith.constant 0 : index
    %c0_0 = arith.constant 0 : index
    %0 = vector.load %arg1[%c0, %c0_0] : memref<2x18xi32, #tpu.memory_space<vmem>>, vector<2x18xi32>
    %1 = tpu.iota {dimensions = array<i32: 2>} : vector<2x15x32xi32>
    %2 = vector.extract_strided_slice %0 {offsets = [0, 0], sizes = [2, 15], strides = [1, 1]} : vector<2x18xi32> to vector<2x15xi32>
    %3 = vector.shape_cast %2 : vector<2x15xi32> to vector<2x15x1xi32>
    %4 = vector.broadcast %3 : vector<2x15x1xi32> to vector<2x15x32xi32>
    %5 = arith.cmpi eq, %4, %1 : vector<2x15x32xi32>
    %6 = arith.extui %5 : vector<2x15x32xi1> to vector<2x15x32xi32>
    %7 = arith.sitofp %6 : vector<2x15x32xi32> to vector<2x15x32xf32>
    %8 = arith.truncf %7 : vector<2x15x32xf32> to vector<2x15x32xbf16>
    %9 = vector.extract_strided_slice %0 {offsets = [0, 1], sizes = [2, 15], strides = [1, 1]} : vector<2x18xi32> to vector<2x15xi32>
    %10 = vector.shape_cast %9 : vector<2x15xi32> to vector<2x15x1xi32>
    %11 = vector.broadcast %10 : vector<2x15x1xi32> to vector<2x15x32xi32>
    %12 = arith.cmpi eq, %11, %1 : vector<2x15x32xi32>
    %13 = arith.extui %12 : vector<2x15x32xi1> to vector<2x15x32xi32>
    %14 = arith.sitofp %13 : vector<2x15x32xi32> to vector<2x15x32xf32>
    %15 = arith.truncf %14 : vector<2x15x32xf32> to vector<2x15x32xbf16>
    %16 = vector.extract_strided_slice %0 {offsets = [0, 2], sizes = [2, 15], strides = [1, 1]} : vector<2x18xi32> to vector<2x15xi32>
    %17 = vector.shape_cast %16 : vector<2x15xi32> to vector<2x15x1xi32>
    %18 = vector.broadcast %17 : vector<2x15x1xi32> to vector<2x15x32xi32>
    %19 = arith.cmpi eq, %18, %1 : vector<2x15x32xi32>
    %20 = arith.extui %19 : vector<2x15x32xi1> to vector<2x15x32xi32>
    %21 = arith.sitofp %20 : vector<2x15x32xi32> to vector<2x15x32xf32>
    %22 = arith.truncf %21 : vector<2x15x32xf32> to vector<2x15x32xbf16>
    %23 = vector.extract_strided_slice %0 {offsets = [0, 3], sizes = [2, 15], strides = [1, 1]} : vector<2x18xi32> to vector<2x15xi32>
    %24 = vector.shape_cast %23 : vector<2x15xi32> to vector<2x15x1xi32>
    %25 = vector.broadcast %24 : vector<2x15x1xi32> to vector<2x15x32xi32>
    %26 = arith.cmpi eq, %25, %1 : vector<2x15x32xi32>
    %27 = arith.extui %26 : vector<2x15x32xi1> to vector<2x15x32xi32>
    %28 = arith.sitofp %27 : vector<2x15x32xi32> to vector<2x15x32xf32>
    %29 = arith.truncf %28 : vector<2x15x32xf32> to vector<2x15x32xbf16>
    %30 = tpu.concatenate %8, %15, %22, %29 in 2 : vector<2x15x32xbf16>, vector<2x15x32xbf16>, vector<2x15x32xbf16>, vector<2x15x32xbf16> -> vector<2x15x128xbf16>
    %31 = vector.shape_cast %30 : vector<2x15x128xbf16> to vector<30x128xbf16>
    %c0_1 = arith.constant 0 : index
    %c0_2 = arith.constant 0 : index
    %32 = vector.load %arg2[%c0_1, %c0_2] : memref<128x128xbf16, #tpu.memory_space<vmem>>, vector<128x128xbf16>
    %cst = arith.constant dense<0.000000e+00> : vector<30x128xf32>
    %33 = tpu.matmul %31, %32, %cst {dimension_numbers = #tpu.dot_dimension_numbers<[1], [0], [0], [1], [0, 0, 1, 1], [], []>} : vector<30x128xbf16>, vector<128x128xbf16>, vector<30x128xf32> -> vector<30x128xf32>
    %34 = vector.shape_cast %33 : vector<30x128xf32> to vector<2x15x128xf32>
    %c0_3 = arith.constant 0 : index
    %c0_4 = arith.constant 0 : index
    %35 = vector.load %arg4[%c0_3, %c0_4] : memref<15x128xf32, #tpu.memory_space<vmem>>, vector<15x128xf32>
    %36 = vector.shape_cast %35 : vector<15x128xf32> to vector<1x15x128xf32>
    %37 = vector.broadcast %36 : vector<1x15x128xf32> to vector<2x15x128xf32>
    %38 = arith.addf %34, %37 : vector<2x15x128xf32>
    %cst_5 = arith.constant dense<0xFF800000> : vector<2x128xf32>
    %39 = vector.multi_reduction <maximumf>, %38, %cst_5 [1] : vector<2x15x128xf32> to vector<2x128xf32>
    %c0_6 = arith.constant 0 : index
    %c0_7 = arith.constant 0 : index
    %40 = vector.load %arg3[%c0_6, %c0_7] : memref<1x128xf32, #tpu.memory_space<vmem>>, vector<1x128xf32>
    %41 = vector.broadcast %40 : vector<1x128xf32> to vector<2x128xf32>
    %42 = arith.addf %39, %41 : vector<2x128xf32>
    %c0_8 = arith.constant 0 : index
    %c0_9 = arith.constant 0 : index
    %43 = vector.load %arg5[%c0_8, %c0_9] : memref<2x128xf32, #tpu.memory_space<vmem>>, vector<2x128xf32>
    tpu.vector_store %arg5[%c0_8, %c0_9], %42 {strides = array<i32>} : memref<2x128xf32, #tpu.memory_space<vmem>>, vector<2x128xf32>,
    return
  }
  func.func @transform_0(%arg0: i32) -> (i32, i32) {
    %c0_i32 = arith.constant 0 : i32
    %c0_i32_0 = arith.constant 0 : i32
    return %arg0, %c0_i32 : i32, i32
  }
  func.func @transform_1(%arg0: i32) -> (i32, i32) {
    %c0_i32 = arith.constant 0 : i32
    %c0_i32_0 = arith.constant 0 : i32
    %c0_i32_1 = arith.constant 0 : i32
    return %c0_i32, %c0_i32_0 : i32, i32
  }
  func.func @transform_2(%arg0: i32) -> (i32, i32) {
    %c0_i32 = arith.constant 0 : i32
    %c0_i32_0 = arith.constant 0 : i32
    %c0_i32_1 = arith.constant 0 : i32
    return %c0_i32, %c0_i32_0 : i32, i32
  }
  func.func @transform_3(%arg0: i32) -> (i32, i32) {
    %c0_i32 = arith.constant 0 : i32
    %c0_i32_0 = arith.constant 0 : i32
    %c0_i32_1 = arith.constant 0 : i32
    return %c0_i32, %c0_i32_0 : i32, i32
  }
  func.func @transform_4(%arg0: i32) -> (i32, i32) {
    %c0_i32 = arith.constant 0 : i32
    %c0_i32_0 = arith.constant 0 : i32
    return %arg0, %c0_i32 : i32, i32
  }
}

</mosaic_0001>

<llo_original>
// kernel: tpu_custom_call.1
$region0: #{tpu_custom_call.1}
  #allocation0 [shape = 'u32[]', space=smem, size = 0x4, offset = 0x4, fixed_abs, tag = 'smem constant byte address 0x4 - core index']
  #allocation1 [shape = 'u32[72,128]{1,0:T(1,128)}', space=vmem, size = 0x9000, scoped, tag = 'internal scratch']
  %s0 = inlined_call_operand.hbm [shape: s32[2,18], index: 0, kind: input, shape index: {}]
  %s1 = inlined_call_operand.hbm [shape: bf16[128,128], index: 1, kind: input, shape index: {}]
  %s2 = inlined_call_operand.vmem [shape: f32[1,128], index: 2, kind: input, shape index: {}]
  %s3 = inlined_call_operand.hbm [shape: f32[15,128], index: 3, kind: input, shape index: {}]
  %s4 = inlined_call_operand.hbm [shape: f32[2,128], index: 4, kind: output, shape index: {}]
  %s5 = sld [smem:[#allocation0]]
  $region38: #{tpu_custom_call.1} parent=0
    _
  %s7 = ssub.s32 1, %s5
  %s8 = scalar_select 0, %s7, %s5
  $region1: #{tpu_custom_call.1} parent=0
    #allocation2 [shape = 'u8[1024]{0}', space=vmem, size = 0x400, scoped, tag = 'input window, operand 0, single buffered']
    #allocation3 [shape = 's32[1]{0}', space=sflag, size = 0x4, scoped, tag = 'scoped memory for tpu_custom_call.1']
    #allocation4 [shape = 's32[1]{0}', space=sflag, size = 0x4, scoped, tag = 'scoped memory for tpu_custom_call.1']
    #allocation5 [shape = 'u8[32768]{0}', space=vmem, size = 0x8000, scoped, tag = 'input window, operand 1, single buffered']
    #allocation6 [shape = 's32[1]{0}', space=sflag, size = 0x4, scoped, tag = 'scoped memory for tpu_custom_call.1']
    #allocation7 [shape = 'u8[8192]{0}', space=vmem, size = 0x2000, scoped, tag = 'input window, operand 3, single buffered']
    #allocation8 [shape = 'u8[1024]{0}', space=vmem, size = 0x400, scoped, tag = 'output window, operand 0, single buffered']
    %9 = vsyncpa [#allocation3], 0
    %10 = vsyncpa [#allocation6], 0
    %11 = vsyncpa [#allocation4], 0
    // Predicated region
    $region2: #{tpu_custom_call.1} parent=1 // pred_check
      _
    $region3: #{tpu_custom_call.1} parent=1 // pred_check_branch
      %13 = sbr.rel (0) target = $region5
    $region4: #{tpu_custom_call.1} parent=1 // pred_region
      %15 = vsyncadd [#allocation3], 0
      %s17 = sshll.u32 %s0, 4
      %s18 = int_to_ptr.hbm [resolvable:$true] %s17
      %s19 = sshll.u32 [#allocation2], 4
      %s20 = int_to_ptr.vmem [resolvable:$true] %s19
      %22 = dma.hbm_to_vmem [thread:$0]  %s18, 32, %s20, [#allocation3]
    $region5: #{tpu_custom_call.1} parent=1 // pred_fallthru
      _
    // Predicated region
    $region6: #{tpu_custom_call.1} parent=1 // pred_check
      _
    $region7: #{tpu_custom_call.1} parent=1 // pred_check_branch
      %24 = sbr.rel (0) target = $region9
    $region8: #{tpu_custom_call.1} parent=1 // pred_region
      %26 = vsyncadd [#allocation6], 0
      %s27 = sshll.u32 %s1, 4
      %s28 = int_to_ptr.hbm [resolvable:$true] %s27
      %s29 = sshll.u32 [#allocation5], 4
      %s30 = int_to_ptr.vmem [resolvable:$true] %s29
      %35 = dma.hbm_to_vmem [thread:$0]  %s28, 1024, %s30, [#allocation6], 64, 64, 4
    $region9: #{tpu_custom_call.1} parent=1 // pred_fallthru
      _
    // Predicated region
    $region10: #{tpu_custom_call.1} parent=1 // pred_check
      _
    $region11: #{tpu_custom_call.1} parent=1 // pred_check_branch
      %37 = sbr.rel (0) target = $region13
    $region12: #{tpu_custom_call.1} parent=1 // pred_region
      _
    $region13: #{tpu_custom_call.1} parent=1 // pred_fallthru
      _
    // Predicated region
    $region14: #{tpu_custom_call.1} parent=1 // pred_check
      _
    $region15: #{tpu_custom_call.1} parent=1 // pred_check_branch
      %39 = sbr.rel (0) target = $region17
    $region16: #{tpu_custom_call.1} parent=1 // pred_region
      %41 = vsyncadd [#allocation6], 0
      %s42 = sshll.u32 %s3, 4
      %s43 = int_to_ptr.hbm [resolvable:$true] %s42
      %s44 = sshll.u32 [#allocation7], 4
      %s45 = int_to_ptr.vmem [resolvable:$true] %s44
      %50 = dma.hbm_to_vmem [thread:$0]  %s43, 256, %s45, [#allocation6], 128, 128, 8
    $region17: #{tpu_custom_call.1} parent=1 // pred_fallthru
      _
    // Predicated region
    $region18: #{tpu_custom_call.1} parent=1 // pred_check
      _
    $region19: #{tpu_custom_call.1} parent=1 // pred_check_branch
      %52 = sbr.rel (0) target = $region21
    $region20: #{tpu_custom_call.1} parent=1 // pred_region
      %54 = dma.done [#allocation3], 32
    $region21: #{tpu_custom_call.1} parent=1 // pred_fallthru
      _
    // Predicated region
    $region22: #{tpu_custom_call.1} parent=1 // pred_check
      _
    $region23: #{tpu_custom_call.1} parent=1 // pred_check_branch
      %56 = sbr.rel (0) target = $region25
    $region24: #{tpu_custom_call.1} parent=1 // pred_region
      %58 = dma.done [#allocation6], 1024
    $region25: #{tpu_custom_call.1} parent=1 // pred_fallthru
      _
    // Predicated region
    $region26: #{tpu_custom_call.1} parent=1 // pred_check
      _
    $region27: #{tpu_custom_call.1} parent=1 // pred_check_branch
      %60 = sbr.rel (0) target = $region29
    $region28: #{tpu_custom_call.1} parent=1 // pred_region
      %62 = dma.done [#allocation6], 256
    $region29: #{tpu_custom_call.1} parent=1 // pred_fallthru
      _
    %v63 = vld [vmem:[#allocation2] sm:$0x3]
    %v64 = vlaneseq
    %v65 = vand.u32 %v64, 127
    %v66 = vperm.slane %v63, 0
    %v67 = vlaneseq
    %v68 = vshrl.u32 %v67, 7
    %70 = vset.pattern.permute.xlu0 %v68
    %71 = vperm.xlu0 %70, %v66
    %v72 = vpop.permute.xlu0 %71
    %v73 = vlaneseq
    %v74 = vshrl.u32 %v73, 7
    %v75 = vadd.s32 %v74, 8
    %76 = vset.pattern.permute.xlu0 %v75
    %77 = vperm.xlu0 %76, %v66
    %v78 = vpop.permute.xlu0 %77
    %v79 = vperm.slane %v63, 1
    %v80 = vlaneseq
    %v81 = vshrl.u32 %v80, 7
    %83 = vset.pattern.permute.xlu0 %v81
    %84 = vperm.xlu0 %83, %v79
    %v85 = vpop.permute.xlu0 %84
    %v86 = vlaneseq
    %v87 = vshrl.u32 %v86, 7
    %v88 = vadd.s32 %v87, 8
    %89 = vset.pattern.permute.xlu0 %v88
    %90 = vperm.xlu0 %89, %v79
    %v91 = vpop.permute.xlu0 %90
    %vm92 = vcmp.eq.s32.totalorder %v72, %v65
    %vm93 = vcmp.eq.s32.totalorder %v78, %v65
    %vm94 = vcmp.eq.s32.totalorder %v85, %v65
    %vm95 = vcmp.eq.s32.totalorder %v91, %v65
    %v96 = vsel %vm92, 1, 0
    %v97 = vsel %vm93, 1, 0
    %v98 = vsel %vm94, 1, 0
    %v99 = vsel %vm95, 1, 0
    %v100 = vcvt.s32.f32 %v96
    %v101 = vcvt.s32.f32 %v97
    %v102 = vcvt.s32.f32 %v98
    %v103 = vcvt.s32.f32 %v99
    %v104 = vpack.c.bf16 %v100, %v100
    %v105 = vpack.c.bf16 %v101, %v101
    %v106 = vpack.c.bf16 %v102, %v102
    %v107 = vpack.c.bf16 %v103, %v103
    %v108 = vlaneseq
    %v109 = vshrl.u32 %v108, 7
    %v110 = vadd.s32 %v109, 1
    %111 = vset.pattern.permute.xlu0 %v110
    %112 = vperm.xlu0 %111, %v66
    %v113 = vpop.permute.xlu0 %112
    %v114 = vlaneseq
    %v115 = vshrl.u32 %v114, 7
    %v116 = vadd.s32 %v115, 9
    %117 = vset.pattern.permute.xlu0 %v116
    %118 = vperm.xlu0 %117, %v66
    %v119 = vpop.permute.xlu0 %118
    %v120 = vlaneseq
    %v121 = vshrl.u32 %v120, 7
    %v122 = vadd.s32 %v121, 1
    %123 = vset.pattern.permute.xlu0 %v122
    %124 = vperm.xlu0 %123, %v79
    %v125 = vpop.permute.xlu0 %124
    %v126 = vlaneseq
    %v127 = vshrl.u32 %v126, 7
    %v128 = vadd.s32 %v127, 9
    %129 = vset.pattern.permute.xlu0 %v128
    %130 = vperm.xlu0 %129, %v79
    %v131 = vpop.permute.xlu0 %130
    %vm132 = vcmp.eq.s32.totalorder %v113, %v65
    %vm133 = vcmp.eq.s32.totalorder %v119, %v65
    %vm134 = vcmp.eq.s32.totalorder %v125, %v65
    %vm135 = vcmp.eq.s32.totalorder %v131, %v65
    %v136 = vsel %vm132, 1, 0
    %v137 = vsel %vm133, 1, 0
    %v138 = vsel %vm134, 1, 0
    %v139 = vsel %vm135, 1, 0
    %v140 = vcvt.s32.f32 %v136
    %v141 = vcvt.s32.f32 %v137
    %v142 = vcvt.s32.f32 %v138
    %v143 = vcvt.s32.f32 %v139
    %v144 = vpack.c.bf16 %v140, %v140
    %v145 = vpack.c.bf16 %v141, %v141
    %v146 = vpack.c.bf16 %v142, %v142
    %v147 = vpack.c.bf16 %v143, %v143
    %v148 = vlaneseq
    %v149 = vshrl.u32 %v148, 7
    %v150 = vadd.s32 %v149, 2
    %151 = vset.pattern.permute.xlu0 %v150
    %152 = vperm.xlu0 %151, %v66
    %v153 = vpop.permute.xlu0 %152
    %v154 = vlaneseq
    %v155 = vshrl.u32 %v154, 7
    %v156 = vadd.s32 %v155, 10
    %157 = vset.pattern.permute.xlu0 %v156
    %158 = vperm.xlu0 %157, %v66
    %v159 = vpop.permute.xlu0 %158
    %v160 = vlaneseq
    %v161 = vshrl.u32 %v160, 7
    %v162 = vadd.s32 %v161, 2
    %163 = vset.pattern.permute.xlu0 %v162
    %164 = vperm.xlu0 %163, %v79
    %v165 = vpop.permute.xlu0 %164
    %v166 = vlaneseq
    %v167 = vshrl.u32 %v166, 7
    %v168 = vadd.s32 %v167, 10
    %169 = vset.pattern.permute.xlu0 %v168
    %170 = vperm.xlu0 %169, %v79
    %v171 = vpop.permute.xlu0 %170
    %vm172 = vcmp.eq.s32.totalorder %v153, %v65
    %vm173 = vcmp.eq.s32.totalorder %v159, %v65
    %vm174 = vcmp.eq.s32.totalorder %v165, %v65
    %vm175 = vcmp.eq.s32.totalorder %v171, %v65
    %v176 = vsel %vm172, 1, 0
    %v177 = vsel %vm173, 1, 0
    %v178 = vsel %vm174, 1, 0
    %v179 = vsel %vm175, 1, 0
    %v180 = vcvt.s32.f32 %v176
    %v181 = vcvt.s32.f32 %v177
    %v182 = vcvt.s32.f32 %v178
    %v183 = vcvt.s32.f32 %v179
    %v184 = vpack.c.bf16 %v180, %v180
    %v185 = vpack.c.bf16 %v181, %v181
    %v186 = vpack.c.bf16 %v182, %v182
    %v187 = vpack.c.bf16 %v183, %v183
    %v188 = vlaneseq
    %v189 = vshrl.u32 %v188, 7
    %v190 = vadd.s32 %v189, 3
    %191 = vset.pattern.permute.xlu0 %v190
    %192 = vperm.xlu0 %191, %v66
    %v193 = vpop.permute.xlu0 %192
    %v194 = vlaneseq
    %v195 = vshrl.u32 %v194, 7
    %v196 = vadd.s32 %v195, 11
    %197 = vset.pattern.permute.xlu0 %v196
    %198 = vperm.xlu0 %197, %v66
    %v199 = vpop.permute.xlu0 %198
    %v200 = vlaneseq
    %v201 = vshrl.u32 %v200, 7
    %v202 = vadd.s32 %v201, 3
    %203 = vset.pattern.permute.xlu0 %v202
    %204 = vperm.xlu0 %203, %v79
    %v205 = vpop.permute.xlu0 %204
    %v206 = vlaneseq
    %v207 = vshrl.u32 %v206, 7
    %v208 = vadd.s32 %v207, 11
    %209 = vset.pattern.permute.xlu0 %v208
    %210 = vperm.xlu0 %209, %v79
    %v211 = vpop.permute.xlu0 %210
    %vm212 = vcmp.eq.s32.totalorder %v193, %v65
    %vm213 = vcmp.eq.s32.totalorder %v199, %v65
    %vm214 = vcmp.eq.s32.totalorder %v205, %v65
    %vm215 = vcmp.eq.s32.totalorder %v211, %v65
    %v216 = vsel %vm212, 1, 0
    %v217 = vsel %vm213, 1, 0
    %v218 = vsel %vm214, 1, 0
    %v219 = vsel %vm215, 1, 0
    %v220 = vcvt.s32.f32 %v216
    %v221 = vcvt.s32.f32 %v217
    %v222 = vcvt.s32.f32 %v218
    %v223 = vcvt.s32.f32 %v219
    %v224 = vpack.c.bf16 %v220, %v220
    %v225 = vpack.c.bf16 %v221, %v221
    %v226 = vpack.c.bf16 %v222, %v222
    %v227 = vpack.c.bf16 %v223, %v223
    %v232 = vunpack.c.l.b16 %v104
    %v233 = vunpack.c.l.b16 %v105
    %v234 = vunpack.c.l.b16 %v106
    %v235 = vunpack.c.l.b16 %v107
    %v236 = vpack.c.b16 %v233, %v232
    %v237 = vpack.c.b16 %v235, %v234
    %v242 = vunpack.c.l.b16 %v144
    %v243 = vunpack.c.l.b16 %v145
    %v244 = vunpack.c.l.b16 %v146
    %v245 = vunpack.c.l.b16 %v147
    %v246 = vpack.c.b16 %v243, %v242
    %v247 = vpack.c.b16 %v245, %v244
    %248 = vrot.lane.b32.xlu0 %v246, 32
    %v249 = vpop.permute.xlu0 %248
    %250 = vrot.lane.b32.xlu0 %v247, 32
    %v251 = vpop.permute.xlu0 %250
    %v256 = vunpack.c.l.b16 %v184
    %v257 = vunpack.c.l.b16 %v185
    %v258 = vunpack.c.l.b16 %v186
    %v259 = vunpack.c.l.b16 %v187
    %v260 = vpack.c.b16 %v257, %v256
    %v261 = vpack.c.b16 %v259, %v258
    %262 = vrot.lane.b32.xlu0 %v260, 64
    %v263 = vpop.permute.xlu0 %262
    %264 = vrot.lane.b32.xlu0 %v261, 64
    %v265 = vpop.permute.xlu0 %264
    %v270 = vunpack.c.l.b16 %v224
    %v271 = vunpack.c.l.b16 %v225
    %v272 = vunpack.c.l.b16 %v226
    %v273 = vunpack.c.l.b16 %v227
    %v274 = vpack.c.b16 %v271, %v270
    %v275 = vpack.c.b16 %v273, %v272
    %276 = vrot.lane.b32.xlu0 %v274, 96
    %v277 = vpop.permute.xlu0 %276
    %278 = vrot.lane.b32.xlu0 %v275, 96
    %v279 = vpop.permute.xlu0 %278
    %vm280 = vcmask 261120
    %v283 = vsel %vm280, %v236, %v249
    %v286 = vsel %vm280, %v237, %v251
    %vm287 = vcmask 523264
    %v289 = vsel %vm287, %v283, %v263
    %v291 = vsel %vm287, %v286, %v265
    %vm292 = vcmask 785408
    %v294 = vsel %vm292, %v289, %v277
    %v296 = vsel %vm292, %v291, %v279
    %v299 = vrot.slane %v294, 1
    %v300 = vrot.slane %v294, 2
    %v301 = vrot.slane %v294, 3
    %v302 = vrot.slane %v294, 4
    %v303 = vrot.slane %v294, 5
    %v304 = vrot.slane %v294, 6
    %v305 = vrot.slane %v294, 7
    %v306 = vrot.slane %v296, 1
    %v307 = vrot.slane %v296, 2
    %v308 = vrot.slane %v296, 3
    %v309 = vrot.slane %v296, 4
    %v310 = vrot.slane %v296, 5
    %v311 = vrot.slane %v296, 6
    %v312 = vrot.slane %v296, 7
    %v313 = vunpack.i.l.s16 %v294
    %v314 = vunpack.i.h.s16 %v294
    %v315 = vunpack.i.l.s16 %v299
    %v316 = vunpack.i.h.s16 %v299
    %v317 = vunpack.i.l.s16 %v300
    %v318 = vunpack.i.h.s16 %v300
    %v319 = vunpack.i.l.s16 %v301
    %v320 = vunpack.i.h.s16 %v301
    %v321 = vunpack.i.l.s16 %v302
    %v322 = vunpack.i.h.s16 %v302
    %v323 = vunpack.i.l.s16 %v303
    %v324 = vunpack.i.h.s16 %v303
    %v325 = vunpack.i.l.s16 %v304
    %v326 = vunpack.i.h.s16 %v304
    %v327 = vunpack.i.l.s16 %v305
    %v328 = vunpack.i.l.s16 %v296
    %v329 = vunpack.i.h.s16 %v296
    %v330 = vunpack.i.l.s16 %v306
    %v331 = vunpack.i.h.s16 %v306
    %v332 = vunpack.i.l.s16 %v307
    %v333 = vunpack.i.h.s16 %v307
    %v334 = vunpack.i.l.s16 %v308
    %v335 = vunpack.i.h.s16 %v308
    %v336 = vunpack.i.l.s16 %v309
    %v337 = vunpack.i.h.s16 %v309
    %v338 = vunpack.i.l.s16 %v310
    %v339 = vunpack.i.h.s16 %v310
    %v340 = vunpack.i.l.s16 %v311
    %v341 = vunpack.i.h.s16 %v311
    %v342 = vunpack.i.l.s16 %v312
    %v343 = vld [vmem:[#allocation5] sm:$0xf]
    %v344 = vld [vmem:[#allocation5 + $0x4] sm:$0xf]
    %v345 = vld [vmem:[#allocation5 + $0x8] sm:$0xf]
    %v346 = vld [vmem:[#allocation5 + $0xc] sm:$0xf]
    %v347 = vld [vmem:[#allocation5 + $0x10] sm:$0xf]
    %v348 = vld [vmem:[#allocation5 + $0x14] sm:$0xf]
    %v349 = vld [vmem:[#allocation5 + $0x18] sm:$0xf]
    %v350 = vld [vmem:[#allocation5 + $0x1c] sm:$0xf]
    %v351 = vld [vmem:[#allocation5 + $0x20] sm:$0xf]
    %v352 = vld [vmem:[#allocation5 + $0x24] sm:$0xf]
    %v353 = vld [vmem:[#allocation5 + $0x28] sm:$0xf]
    %v354 = vld [vmem:[#allocation5 + $0x2c] sm:$0xf]
    %v355 = vld [vmem:[#allocation5 + $0x30] sm:$0xf]
    %v356 = vld [vmem:[#allocation5 + $0x34] sm:$0xf]
    %v357 = vld [vmem:[#allocation5 + $0x38] sm:$0xf]
    %v358 = vld [vmem:[#allocation5 + $0x3c] sm:$0xf]
    %v359 = vpack.i.b16 %v314, %v313
    %v360 = vpack.i.b16 %v316, %v315
    %v361 = vpack.i.b16 %v318, %v317
    %v362 = vpack.i.b16 %v320, %v319
    %v363 = vpack.i.b16 %v322, %v321
    %v364 = vpack.i.b16 %v324, %v323
    %v365 = vpack.i.b16 %v326, %v325
    %v366 = vpack.i.b16 %v328, %v327
    %v367 = vpack.i.b16 %v330, %v329
    %v368 = vpack.i.b16 %v332, %v331
    %v369 = vpack.i.b16 %v334, %v333
    %v370 = vpack.i.b16 %v336, %v335
    %v371 = vpack.i.b16 %v338, %v337
    %v372 = vpack.i.b16 %v340, %v339
    %v373 = vpack.i.b16 %v342, %v341
    %375 = vst [vmem:[#allocation1] ss:$9 sm:$0xff] %v359
    %s377 = scalar_lea.vmem [#allocation1], 1
    %378 = vst [vmem:[%s377] ss:$9 sm:$0xff] %v360
    %s380 = scalar_lea.vmem [#allocation1], 2
    %381 = vst [vmem:[%s380] ss:$9 sm:$0xff] %v361
    %s383 = scalar_lea.vmem [#allocation1], 3
    %384 = vst [vmem:[%s383] ss:$9 sm:$0xff] %v362
    %s386 = scalar_lea.vmem [#allocation1], 4
    %387 = vst [vmem:[%s386] ss:$9 sm:$0xff] %v363
    %s389 = scalar_lea.vmem [#allocation1], 5
    %390 = vst [vmem:[%s389] ss:$9 sm:$0xff] %v364
    %s392 = scalar_lea.vmem [#allocation1], 6
    %393 = vst [vmem:[%s392] ss:$9 sm:$0xff] %v365
    %s395 = scalar_lea.vmem [#allocation1], 7
    %396 = vst [vmem:[%s395] ss:$9 sm:$0xff] %v366
    %v397 = vld [vmem:[#allocation1] sm:$0xff]
    %399 = vst [vmem:[#allocation1] ss:$9 sm:$0xff] %v367
    %401 = vst [vmem:[%s377] ss:$9 sm:$0xff] %v368
    %403 = vst [vmem:[%s380] ss:$9 sm:$0xff] %v369
    %405 = vst [vmem:[%s383] ss:$9 sm:$0xff] %v370
    %407 = vst [vmem:[%s386] ss:$9 sm:$0xff] %v371
    %409 = vst [vmem:[%s389] ss:$9 sm:$0xff] %v372
    %411 = vst [vmem:[%s392] ss:$9 sm:$0xff] %v373
    %v412 = vld [vmem:[#allocation1] sm:$0xff]
    %v431 = vunpack.c.l.b16 %v343
    %v432 = vunpack.c.l.b16 %v344
    %v433 = vunpack.c.l.b16 %v345
    %v434 = vunpack.c.l.b16 %v346
    %v435 = vunpack.c.l.b16 %v347
    %v436 = vunpack.c.l.b16 %v348
    %v437 = vunpack.c.l.b16 %v349
    %v438 = vunpack.c.l.b16 %v350
    %v439 = vunpack.c.l.b16 %v351
    %v440 = vunpack.c.l.b16 %v352
    %v441 = vunpack.c.l.b16 %v353
    %v442 = vunpack.c.l.b16 %v354
    %v443 = vunpack.c.l.b16 %v355
    %v444 = vunpack.c.l.b16 %v356
    %v445 = vunpack.c.l.b16 %v357
    %v446 = vunpack.c.l.b16 %v358
    %v447 = vpack.c.b16 %v432, %v431
    %v448 = vpack.c.b16 %v434, %v433
    %v449 = vpack.c.b16 %v436, %v435
    %v450 = vpack.c.b16 %v438, %v437
    %v451 = vpack.c.b16 %v440, %v439
    %v452 = vpack.c.b16 %v442, %v441
    %v453 = vpack.c.b16 %v444, %v443
    %v454 = vpack.c.b16 %v446, %v445
    %463 = vmatpush.bf16.msra.mxu0 %v454
    %464 = vmatpush.bf16.msra.mxu0 %v453
    %465 = vmatpush.bf16.msra.mxu0 %v452
    %466 = vmatpush.bf16.msra.mxu0 %v451
    %467 = vmatpush.bf16.msra.mxu0 %v450
    %468 = vmatpush.bf16.msra.mxu0 %v449
    %469 = vmatpush.bf16.msra.mxu0 %v448
    %470 = vmatpush.bf16.msra.mxu0 %v447
    %471 = vmatmul.bf16.gmra.mxu0 %v397
    %v472 = vpop.f32.mrf.mxu0
    %v473 = vadd.f32 0.0, %v472
    %v474 = vpop.f32.mrf.mxu0
    %v475 = vadd.f32 0.0, %v474
    %476 = vmatmul.bf16.gmra.mxu0 %v412
    %v477 = vpop.f32.mrf.mxu0
    %v478 = vadd.f32 0.0, %v477
    %v479 = vpop.f32.mrf.mxu0
    %v480 = vadd.f32 0.0, %v479
    %481 = vdwg.mxu0
    %v486 = vrot.slane %v473, 1
    %v487 = vrot.slane %v473, 2
    %v488 = vrot.slane %v473, 3
    %v489 = vrot.slane %v473, 4
    %v490 = vrot.slane %v473, 5
    %v491 = vrot.slane %v473, 6
    %v492 = vrot.slane %v473, 7
    %v493 = vrot.slane %v475, 1
    %v494 = vrot.slane %v475, 2
    %v495 = vrot.slane %v475, 3
    %v496 = vrot.slane %v475, 4
    %v497 = vrot.slane %v475, 5
    %v498 = vrot.slane %v475, 6
    %v499 = vrot.slane %v475, 7
    %v500 = vrot.slane %v478, 1
    %v501 = vrot.slane %v478, 2
    %v502 = vrot.slane %v478, 3
    %v503 = vrot.slane %v478, 4
    %v504 = vrot.slane %v478, 5
    %v505 = vrot.slane %v478, 6
    %v506 = vrot.slane %v478, 7
    %v507 = vrot.slane %v480, 1
    %v508 = vrot.slane %v480, 2
    %v509 = vrot.slane %v480, 3
    %v510 = vrot.slane %v480, 4
    %v511 = vrot.slane %v480, 5
    %v538 = vld [vmem:[#allocation7] sm:$0xff]
    %v539 = vld [vmem:[#allocation7 + $0x8] sm:$0x7f]
    %v542 = vrot.slane %v538, 1
    %v543 = vrot.slane %v538, 2
    %v544 = vrot.slane %v538, 3
    %v545 = vrot.slane %v538, 4
    %v546 = vrot.slane %v538, 5
    %v547 = vrot.slane %v538, 6
    %v548 = vrot.slane %v538, 7
    %v549 = vrot.slane %v539, 1
    %v550 = vrot.slane %v539, 2
    %v551 = vrot.slane %v539, 3
    %v552 = vrot.slane %v539, 4
    %v553 = vrot.slane %v539, 5
    %v554 = vrot.slane %v539, 6
    %v568 = vadd.f32 %v473, %v538
    %v569 = vadd.f32 %v486, %v542
    %v570 = vadd.f32 %v487, %v543
    %v571 = vadd.f32 %v488, %v544
    %v572 = vadd.f32 %v489, %v545
    %v573 = vadd.f32 %v490, %v546
    %v574 = vadd.f32 %v491, %v547
    %v575 = vadd.f32 %v492, %v548
    %v576 = vadd.f32 %v475, %v539
    %v577 = vadd.f32 %v493, %v549
    %v578 = vadd.f32 %v494, %v550
    %v579 = vadd.f32 %v495, %v551
    %v580 = vadd.f32 %v496, %v552
    %v581 = vadd.f32 %v497, %v553
    %v582 = vadd.f32 %v498, %v554
    %v583 = vadd.f32 %v499, %v538
    %v584 = vadd.f32 %v478, %v542
    %v585 = vadd.f32 %v500, %v543
    %v586 = vadd.f32 %v501, %v544
    %v587 = vadd.f32 %v502, %v545
    %v588 = vadd.f32 %v503, %v546
    %v589 = vadd.f32 %v504, %v547
    %v590 = vadd.f32 %v505, %v548
    %v591 = vadd.f32 %v506, %v539
    %v592 = vadd.f32 %v480, %v549
    %v593 = vadd.f32 %v507, %v550
    %v594 = vadd.f32 %v508, %v551
    %v595 = vadd.f32 %v509, %v552
    %v596 = vadd.f32 %v510, %v553
    %v597 = vadd.f32 %v511, %v554
    %628 = vst [vmem:[#allocation1] ss:$9 sm:$0xff] %v568
    %s629 = scalar_lea.vmem [#allocation1], 1
    %630 = vst [vmem:[%s629] ss:$9 sm:$0xff] %v569
    %s631 = scalar_lea.vmem [#allocation1], 2
    %632 = vst [vmem:[%s631] ss:$9 sm:$0xff] %v570
    %s633 = scalar_lea.vmem [#allocation1], 3
    %634 = vst [vmem:[%s633] ss:$9 sm:$0xff] %v571
    %s635 = scalar_lea.vmem [#allocation1], 4
    %636 = vst [vmem:[%s635] ss:$9 sm:$0xff] %v572
    %s637 = scalar_lea.vmem [#allocation1], 5
    %638 = vst [vmem:[%s637] ss:$9 sm:$0xff] %v573
    %s639 = scalar_lea.vmem [#allocation1], 6
    %640 = vst [vmem:[%s639] ss:$9 sm:$0xff] %v574
    %s641 = scalar_lea.vmem [#allocation1], 7
    %642 = vst [vmem:[%s641] ss:$9 sm:$0xff] %v575
    %v643 = vld [vmem:[#allocation1] sm:$0xff]
    %644 = vst [vmem:[#allocation1] ss:$9 sm:$0xff] %v576
    %645 = vst [vmem:[%s629] ss:$9 sm:$0xff] %v577
    %646 = vst [vmem:[%s631] ss:$9 sm:$0xff] %v578
    %647 = vst [vmem:[%s633] ss:$9 sm:$0xff] %v579
    %648 = vst [vmem:[%s635] ss:$9 sm:$0xff] %v580
    %649 = vst [vmem:[%s637] ss:$9 sm:$0xff] %v581
    %650 = vst [vmem:[%s639] ss:$9 sm:$0xff] %v582
    %v651 = vld [vmem:[#allocation1] sm:$0xff]
    %652 = vst [vmem:[#allocation1] ss:$9 sm:$0xff] %v583
    %653 = vst [vmem:[%s629] ss:$9 sm:$0xff] %v584
    %654 = vst [vmem:[%s631] ss:$9 sm:$0xff] %v585
    %655 = vst [vmem:[%s633] ss:$9 sm:$0xff] %v586
    %656 = vst [vmem:[%s635] ss:$9 sm:$0xff] %v587
    %657 = vst [vmem:[%s637] ss:$9 sm:$0xff] %v588
    %658 = vst [vmem:[%s639] ss:$9 sm:$0xff] %v589
    %659 = vst [vmem:[%s641] ss:$9 sm:$0xff] %v590
    %v660 = vld [vmem:[#allocation1] sm:$0xff]
    %661 = vst [vmem:[#allocation1] ss:$9 sm:$0xff] %v591
    %662 = vst [vmem:[%s629] ss:$9 sm:$0xff] %v592
    %663 = vst [vmem:[%s631] ss:$9 sm:$0xff] %v593
    %664 = vst [vmem:[%s633] ss:$9 sm:$0xff] %v594
    %665 = vst [vmem:[%s635] ss:$9 sm:$0xff] %v595
    %666 = vst [vmem:[%s637] ss:$9 sm:$0xff] %v596
    %667 = vst [vmem:[%s639] ss:$9 sm:$0xff] %v597
    %v668 = vld [vmem:[#allocation1] sm:$0xff]
    %vm673 = vcmask 1046528
    %v674 = vsel %vm673, %v651, -inf
    %v675 = vmax.f32 %v643, %v674
    %v676 = vrot.slane %v675, 4
    %v677 = vmax.f32 %v675, %v676
    %v678 = vrot.slane %v677, 2
    %v679 = vmax.f32 %v677, %v678
    %v680 = vrot.slane %v679, 1
    %v681 = vmax.f32 %v679, %v680
    %v682 = vsel %vm673, %v668, -inf
    %v683 = vmax.f32 %v660, %v682
    %v684 = vrot.slane %v683, 4
    %v685 = vmax.f32 %v683, %v684
    %v686 = vrot.slane %v685, 2
    %v687 = vmax.f32 %v685, %v686
    %v688 = vrot.slane %v687, 1
    %v689 = vmax.f32 %v687, %v688
    %v690 = vld [vmem:[%s2] sm:$0x1]
    %v692 = vperm.slane %v690, 0
    %v694 = vadd.f32 %v681, %v692
    %v695 = vadd.f32 %v689, %v692
    %v698 = vrot.slane %v695, 7
    %vm699 = vcmask 1041409
    %v700 = vsel %vm699, %v698, %v694
    %702 = vst [vmem:[#allocation8] sm:$0x3] %v700
    // Predicated region
    $region30: #{tpu_custom_call.1} parent=1 // pred_check
      _
    $region31: #{tpu_custom_call.1} parent=1 // pred_check_branch
      %704 = sbr.rel (0) target = $region33
    $region32: #{tpu_custom_call.1} parent=1 // pred_region
      %706 = vsyncadd [#allocation4], 0
      %s708 = sshll.u32 [#allocation8], 4
      %s709 = int_to_ptr.vmem [resolvable:$true] %s708
      %s710 = sshll.u32 %s4, 4
      %s711 = int_to_ptr.hbm [resolvable:$true] %s710
      %713 = dma.vmem_to_hbm [thread:$0]  %s709, 32, %s711, [#allocation4]
    $region33: #{tpu_custom_call.1} parent=1 // pred_fallthru
      _
    // Predicated region
    $region34: #{tpu_custom_call.1} parent=1 // pred_check
      _
    $region35: #{tpu_custom_call.1} parent=1 // pred_check_branch
      %715 = sbr.rel (0) target = $region37
    $region36: #{tpu_custom_call.1} parent=1 // pred_region
      %717 = dma.done [#allocation4], 32
    $region37: #{tpu_custom_call.1} parent=1 // pred_fallthru
      _
    %718 = vsyncpa [#allocation3], 1
    %719 = vsyncpa [#allocation6], 1
    %720 = vsyncpa [#allocation4], 1

</llo_original>
